<compile_context>
chip_gen: v7x
topology: tpu7x:2x2x1
jax: 0.10.0
libtpu: 0.0.40
codegen_flags: <defaults>
</compile_context>

<pallas_src>
import jax
import jax.numpy as jnp
from jax.experimental import pallas as pl
from jax.experimental.pallas import tpu as pltpu


def _round_up(x, m):
    return (x + m - 1) // m * m


def _largest_tile(dim, cap):
    """Largest multiple of 128 that divides `dim` (itself a multiple of 128) and is <= cap."""
    cap = max(128, min(cap, dim))
    t = cap - cap % 128
    while t > 128:
        if dim % t == 0:
            return t
        t -= 128
    return 128


# ----------------------------------------------------------------------------
# Kernels
# ----------------------------------------------------------------------------
def _linear_kernel_1k(x_ref, wt_ref, b_ref, o_ref):
    # Single K step: no accumulator scratch, fully parallel grid.
    acc = jnp.dot(x_ref[...], wt_ref[...], preferred_element_type=jnp.float32)
    o_ref[...] = (acc + b_ref[...]).astype(o_ref.dtype)


def _linear_kernel_acc(x_ref, wt_ref, b_ref, o_ref, acc_ref):
    # Multi K step: f32 VMEM accumulator, bias added once in the finalize step.
    k = pl.program_id(2)

    @pl.when(k == 0)
    def _init():
        acc_ref[...] = jnp.zeros_like(acc_ref)

    acc_ref[...] += jnp.dot(
        x_ref[...], wt_ref[...], preferred_element_type=jnp.float32
    )

    @pl.when(k == pl.num_programs(2) - 1)
    def _finalize():
        o_ref[...] = (acc_ref[...] + b_ref[...]).astype(o_ref.dtype)


# ----------------------------------------------------------------------------
# One-time parameter preparation (NOT per forward call):
#   - transpose PyTorch-layout (C, F) weight to (F, C)
#   - zero-pad F and C up to the 128-lane boundary only (minimal padding)
#   - optionally cast MXU operands to bf16 (fast path on every TPU generation)
# ----------------------------------------------------------------------------
def prepare_params(w, b, *, compute_dtype=jnp.float32):
    num_classes, in_features = w.shape
    f_pad = _round_up(in_features, 128)
    c_pad = _round_up(num_classes, 128)

    w_t = jnp.zeros((f_pad, c_pad), compute_dtype)
    w_t = w_t.at[:in_features, :num_classes].set(w.T.astype(compute_dtype))
    # Bias stays f32 (epilogue is done in f32 on every chip generation).
    b_pad = jnp.zeros((1, c_pad), jnp.float32).at[0, :num_classes].set(
        b.astype(jnp.float32)
    )
    return w_t, b_pad


# ----------------------------------------------------------------------------
# Forward pass.
#   x:        (B, F) activations (any float dtype)
#   w_t_pad:  (F_pad, C_pad) pre-transposed, pre-padded weight from prepare_params
#   b_pad:    (1, C_pad) pre-padded f32 bias from prepare_params
# Returns (B, num_classes) in x.dtype.
# ----------------------------------------------------------------------------
def classifier_forward(x, w_t_pad, b_pad, num_classes,
                       *, tm_cap=512, tk_cap=None, tn_cap=1024):
    batch, in_features = x.shape
    f_pad, c_pad = w_t_pad.shape
    compute_dtype = w_t_pad.dtype
    itemsize = jnp.dtype(compute_dtype).itemsize
    out_dtype = x.dtype
    out_itemsize = jnp.dtype(out_dtype).itemsize

    # ---- tile selection -----------------------------------------------------
    # tm is the weight-reuse knob: whole batch in one tile when it fits
    # (weights read from HBM exactly once); otherwise MXU-aligned 512-row tiles.
    if batch <= tm_cap:
        tm = max(16, _round_up(batch, 16))
    else:
        tm = tm_cap
    b_padded = _round_up(batch, tm)

    if tk_cap is None:
        tk_cap = 4096 if itemsize <= 2 else 2048
    tk = _largest_tile(f_pad, tk_cap)
    tn = _largest_tile(c_pad, tn_cap)

    # v7x megacore: if both parallel axes collapsed to a single block, split N
    # so both TensorCores get work (harmless ~0.35us extra step elsewhere).
    if b_padded // tm == 1 and c_pad // tn == 1 and c_pad >= 256:
        tn = _largest_tile(c_pad, c_pad // 2)

    n_k = f_pad // tk

    # ---- activation prep: cast + pad fused, skipped entirely when aligned ----
    x_p = x if x.dtype == compute_dtype else x.astype(compute_dtype)
    pad_m, pad_k = b_padded - batch, f_pad - in_features
    if pad_m or pad_k:
        x_p = jnp.pad(x_p, ((0, pad_m), (0, pad_k)))

    # ---- VMEM budget: double-buffered tiles (+ f32 accumulator), 48 MiB cap (v7x-safe) ----
    vmem_needed = 2 * (tm * tk * itemsize + tk * tn * itemsize
                       + tm * tn * out_itemsize + tn * 4)
    if n_k > 1:
        vmem_needed += tm * tn * 4
    vmem_limit = int(min(max(vmem_needed + (8 << 20), 32 << 20), 48 << 20))

    out_shape = jax.ShapeDtypeStruct((b_padded, c_pad), out_dtype)

    if n_k == 1:
        # Fast path: no reduction axis, no accumulator, fully parallel grid.
        out = pl.pallas_call(
            _linear_kernel_1k,
            out_shape=out_shape,
            grid=(b_padded // tm, c_pad // tn),
            in_specs=[
                pl.BlockSpec((tm, tk), lambda i, j: (i, 0)),   # x tile
                pl.BlockSpec((tk, tn), lambda i, j: (0, j)),   # W^T tile
                pl.BlockSpec((1, tn), lambda i, j: (0, j)),    # bias tile
            ],
            out_specs=pl.BlockSpec((tm, tn), lambda i, j: (i, j)),
            compiler_params=pltpu.CompilerParams(
                dimension_semantics=("parallel", "parallel"),
                vmem_limit_bytes=vmem_limit,
            ),
        )(x_p, w_t_pad, b_pad)
    else:
        out = pl.pallas_call(
            _linear_kernel_acc,
            out_shape=out_shape,
            grid=(b_padded // tm, c_pad // tn, n_k),
            in_specs=[
                pl.BlockSpec((tm, tk), lambda i, j, k: (i, k)),   # x tile
                pl.BlockSpec((tk, tn), lambda i, j, k: (k, j)),   # W^T tile
                pl.BlockSpec((1, tn), lambda i, j, k: (0, j)),    # bias tile
            ],
            out_specs=pl.BlockSpec((tm, tn), lambda i, j, k: (i, j)),
            scratch_shapes=[pltpu.VMEM((tm, tn), jnp.float32)],   # f32 accumulator
            compiler_params=pltpu.CompilerParams(
                dimension_semantics=("parallel", "parallel", "arbitrary"),
                vmem_limit_bytes=vmem_limit,
            ),
        )(x_p, w_t_pad, b_pad)

    # Strip padding only if any was applied (no-op copy avoided otherwise).
    if b_padded == batch and c_pad == num_classes:
        return out
    return out[:batch, :num_classes]


if __name__ == "__main__":
    # Small shapes implied by the module: a plain Linear classifier head.
    batch = 8
    in_features = 32
    num_classes = 16

    key = jax.random.PRNGKey(0)
    kx, kw, kb = jax.random.split(key, 3)

    # Deterministic init mimicking nn.Linear's uniform(-k, k), k = 1/sqrt(in_features)
    bound = 1.0 / (in_features ** 0.5)
    w = jax.random.uniform(kw, (num_classes, in_features), jnp.float32, -bound, bound)
    b = jax.random.uniform(kb, (num_classes,), jnp.float32, -bound, bound)
    x = jax.random.normal(kx, (batch, in_features), jnp.float32)

    # --- f32 MXU operands, single-K fast path: exact match vs f32 reference ---
    w_t_f32, b_pad_f32 = prepare_params(w, b, compute_dtype=jnp.float32)
    out = classifier_forward(x, w_t_f32, b_pad_f32, num_classes)
    jax.block_until_ready(out)

    ref = x @ w.T + b
    assert out.shape == (batch, num_classes)
    assert jnp.allclose(out, ref, atol=1e-5, rtol=1e-5), "f32 mismatch vs reference"

    # --- bf16 MXU operands (fast path on every generation), f32 accumulation ---
    w_t_bf16, b_pad_bf16 = prepare_params(w, b, compute_dtype=jnp.bfloat16)
    out_bf = classifier_forward(x, w_t_bf16, b_pad_bf16, num_classes)
    jax.block_until_ready(out_bf)

    ref_bf = jnp.dot(
        x.astype(jnp.bfloat16), w.T.astype(jnp.bfloat16),
        preferred_element_type=jnp.float32,
    ) + b
    assert out_bf.shape == (batch, num_classes)
    assert jnp.allclose(out_bf, ref_bf, atol=1e-2, rtol=1e-2), "bf16 mismatch"

    # --- multi-K accumulator path (forced small tk so the reduction axis is exercised) ---
    batch2, in_features2, num_classes2 = 10, 384, 24
    kx2, kw2, kb2 = jax.random.split(jax.random.PRNGKey(1), 3)
    bound2 = 1.0 / (in_features2 ** 0.5)
    w2 = jax.random.uniform(kw2, (num_classes2, in_features2), jnp.float32, -bound2, bound2)
    b2 = jax.random.uniform(kb2, (num_classes2,), jnp.float32, -bound2, bound2)
    x2 = jax.random.normal(kx2, (batch2, in_features2), jnp.float32)

    w_t2, b_pad2 = prepare_params(w2, b2, compute_dtype=jnp.float32)
    out2 = classifier_forward(x2, w_t2, b_pad2, num_classes2, tk_cap=128)
    jax.block_until_ready(out2)

    ref2 = x2 @ w2.T + b2
    assert out2.shape == (batch2, num_classes2)
    assert jnp.allclose(out2, ref2, atol=1e-4, rtol=1e-4), "multi-K mismatch"

    print("KERNEL_OK")
</pallas_src>

<mosaic_0001>
module attributes {stable_mosaic.version = 11 : i64} {
  func.func @_linear_kernel_1k(%arg0: i32, %arg1: i32, %arg2: memref<16x128xf32, #tpu.memory_space<vmem>>, %arg3: memref<128x128xf32, #tpu.memory_space<vmem>>, %arg4: memref<1x128xf32, #tpu.memory_space<vmem>>, %arg5: memref<16x128xf32, #tpu.memory_space<vmem>>) attributes {dimension_semantics = [#tpu.dimension_semantics<parallel>, #tpu.dimension_semantics<parallel>], iteration_bounds = array<i64: 1, 1>, scalar_prefetch = 0 : i64, scratch_operands = 0 : i64, tpu.core_type = #tpu.core_type<tc>, window_params = [{transform_indices = @transform_0, window_bounds = array<i64: 16, 128>}, {transform_indices = @transform_1, window_bounds = array<i64: 128, 128>}, {transform_indices = @transform_2, window_bounds = array<i64: 1, 128>}, {transform_indices = @transform_3, window_bounds = array<i64: 16, 128>}]} {
    %c0 = arith.constant 0 : index
    %c0_0 = arith.constant 0 : index
    %0 = vector.load %arg2[%c0, %c0_0] : memref<16x128xf32, #tpu.memory_space<vmem>>, vector<16x128xf32>
    %c0_1 = arith.constant 0 : index
    %c0_2 = arith.constant 0 : index
    %1 = vector.load %arg3[%c0_1, %c0_2] : memref<128x128xf32, #tpu.memory_space<vmem>>, vector<128x128xf32>
    %cst = arith.constant dense<0.000000e+00> : vector<16x128xf32>
    %2 = tpu.matmul %0, %1, %cst {dimension_numbers = #tpu.dot_dimension_numbers<[1], [0], [0], [1], [0, 0, 1, 1], [], []>} : vector<16x128xf32>, vector<128x128xf32>, vector<16x128xf32> -> vector<16x128xf32>
    %c0_3 = arith.constant 0 : index
    %c0_4 = arith.constant 0 : index
    %3 = vector.load %arg4[%c0_3, %c0_4] : memref<1x128xf32, #tpu.memory_space<vmem>>, vector<1x128xf32>
    %4 = vector.broadcast %3 : vector<1x128xf32> to vector<16x128xf32>
    %5 = arith.addf %2, %4 : vector<16x128xf32>
    %c0_5 = arith.constant 0 : index
    %c0_6 = arith.constant 0 : index
    %6 = vector.load %arg5[%c0_5, %c0_6] : memref<16x128xf32, #tpu.memory_space<vmem>>, vector<16x128xf32>
    tpu.vector_store %arg5[%c0_5, %c0_6], %5 {strides = array<i32>} : memref<16x128xf32, #tpu.memory_space<vmem>>, vector<16x128xf32>,
    return
  }
  func.func @transform_0(%arg0: i32, %arg1: i32) -> (i32, i32) {
    %c0_i32 = arith.constant 0 : i32
    %c0_i32_0 = arith.constant 0 : i32
    return %arg0, %c0_i32 : i32, i32
  }
  func.func @transform_1(%arg0: i32, %arg1: i32) -> (i32, i32) {
    %c0_i32 = arith.constant 0 : i32
    %c0_i32_0 = arith.constant 0 : i32
    return %c0_i32, %arg1 : i32, i32
  }
  func.func @transform_2(%arg0: i32, %arg1: i32) -> (i32, i32) {
    %c0_i32 = arith.constant 0 : i32
    %c0_i32_0 = arith.constant 0 : i32
    return %c0_i32, %arg1 : i32, i32
  }
  func.func @transform_3(%arg0: i32, %arg1: i32) -> (i32, i32) {
    %c0_i32 = arith.constant 0 : i32
    return %arg0, %arg1 : i32, i32
  }
}

</mosaic_0001>

<llo_original>
// kernel: tpu_custom_call.1
$region0: #{tpu_custom_call.1}
  #allocation0 [shape = 'u32[]', space=smem, size = 0x4, offset = 0x4, fixed_abs, tag = 'smem constant byte address 0x4 - core index']
  #allocation1 [shape = 'u32[144,128]{1,0:T(1,128)}', space=vmem, size = 0x12000, scoped, tag = 'internal scratch']
  %s0 = inlined_call_operand.hbm [shape: f32[16,128], index: 0, kind: input, shape index: {}]
  %s1 = inlined_call_operand.hbm [shape: f32[128,128], index: 1, kind: input, shape index: {}]
  %s2 = inlined_call_operand.vmem [shape: f32[1,128], index: 2, kind: input, shape index: {}]
  %s3 = inlined_call_operand.hbm [shape: f32[16,128], index: 3, kind: output, shape index: {}]
  %s4 = sld [smem:[#allocation0]]
  $region30: #{tpu_custom_call.1} parent=0
    _
  %s6 = ssub.s32 1, %s4
  %s7 = scalar_select 0, %s6, %s4
  $region1: #{tpu_custom_call.1} parent=0
    #allocation2 [shape = 'u8[8192]{0}', space=vmem, size = 0x2000, scoped, tag = 'input window, operand 0, single buffered']
    #allocation3 [shape = 's32[1]{0}', space=sflag, size = 0x4, scoped, tag = 'scoped memory for tpu_custom_call.1']
    #allocation4 [shape = 's32[1]{0}', space=sflag, size = 0x4, scoped, tag = 'scoped memory for tpu_custom_call.1']
    #allocation5 [shape = 'u8[65536]{0}', space=vmem, size = 0x10000, scoped, tag = 'input window, operand 1, single buffered']
    #allocation6 [shape = 's32[1]{0}', space=sflag, size = 0x4, scoped, tag = 'scoped memory for tpu_custom_call.1']
    #allocation7 [shape = 'u8[8192]{0}', space=vmem, size = 0x2000, scoped, tag = 'output window, operand 0, single buffered']
    %8 = vsyncpa [#allocation3], 0
    %9 = vsyncpa [#allocation6], 0
    %10 = vsyncpa [#allocation4], 0
    // Predicated region
    $region2: #{tpu_custom_call.1} parent=1 // pred_check
      _
    $region3: #{tpu_custom_call.1} parent=1 // pred_check_branch
      %12 = sbr.rel (0) target = $region5
    $region4: #{tpu_custom_call.1} parent=1 // pred_region
      %s14 = ssub.s32 256, 256
      %15 = vsyncadd [#allocation3], %s14
      %s16 = sshll.u32 [#allocation2], 4
      %s17 = int_to_ptr.vmem [resolvable:$true] %s16
      %22 = dma.hbm_to_vmem [thread:$0]  %s0, 256, %s17, [#allocation3], 128, 128, 8
    $region5: #{tpu_custom_call.1} parent=1 // pred_fallthru
      _
    // Predicated region
    $region6: #{tpu_custom_call.1} parent=1 // pred_check
      _
    $region7: #{tpu_custom_call.1} parent=1 // pred_check_branch
      %24 = sbr.rel (0) target = $region9
    $region8: #{tpu_custom_call.1} parent=1 // pred_region
      %s26 = ssub.s32 2048, 2048
      %27 = vsyncadd [#allocation6], %s26
      %s28 = sshll.u32 [#allocation5], 4
      %s29 = int_to_ptr.vmem [resolvable:$true] %s28
      %34 = dma.hbm_to_vmem [thread:$0]  %s1, 2048, %s29, [#allocation6], 128, 128, 8
    $region9: #{tpu_custom_call.1} parent=1 // pred_fallthru
      _
    // Predicated region
    $region10: #{tpu_custom_call.1} parent=1 // pred_check
      _
    $region11: #{tpu_custom_call.1} parent=1 // pred_check_branch
      %36 = sbr.rel (0) target = $region13
    $region12: #{tpu_custom_call.1} parent=1 // pred_region
      _
    $region13: #{tpu_custom_call.1} parent=1 // pred_fallthru
      _
    // Predicated region
    $region14: #{tpu_custom_call.1} parent=1 // pred_check
      _
    $region15: #{tpu_custom_call.1} parent=1 // pred_check_branch
      %38 = sbr.rel (0) target = $region17
    $region16: #{tpu_custom_call.1} parent=1 // pred_region
      %39 = dma.done [#allocation3], 256
    $region17: #{tpu_custom_call.1} parent=1 // pred_fallthru
      _
    // Predicated region
    $region18: #{tpu_custom_call.1} parent=1 // pred_check
      _
    $region19: #{tpu_custom_call.1} parent=1 // pred_check_branch
      %41 = sbr.rel (0) target = $region21
    $region20: #{tpu_custom_call.1} parent=1 // pred_region
      %42 = dma.done [#allocation6], 2048
    $region21: #{tpu_custom_call.1} parent=1 // pred_fallthru
      _
    %v43 = vld [vmem:[#allocation2] sm:$0xff]
    %v44 = vld [vmem:[#allocation2 + $0x8] sm:$0xff]
    %v45 = vld [vmem:[#allocation5] sm:$0xff]
    %v46 = vld [vmem:[#allocation5 + $0x8] sm:$0xff]
    %v47 = vld [vmem:[#allocation5 + $0x10] sm:$0xff]
    %v48 = vld [vmem:[#allocation5 + $0x18] sm:$0xff]
    %v49 = vld [vmem:[#allocation5 + $0x20] sm:$0xff]
    %v50 = vld [vmem:[#allocation5 + $0x28] sm:$0xff]
    %v51 = vld [vmem:[#allocation5 + $0x30] sm:$0xff]
    %v52 = vld [vmem:[#allocation5 + $0x38] sm:$0xff]
    %v53 = vld [vmem:[#allocation5 + $0x40] sm:$0xff]
    %v54 = vld [vmem:[#allocation5 + $0x48] sm:$0xff]
    %v55 = vld [vmem:[#allocation5 + $0x50] sm:$0xff]
    %v56 = vld [vmem:[#allocation5 + $0x58] sm:$0xff]
    %v57 = vld [vmem:[#allocation5 + $0x60] sm:$0xff]
    %v58 = vld [vmem:[#allocation5 + $0x68] sm:$0xff]
    %v59 = vld [vmem:[#allocation5 + $0x70] sm:$0xff]
    %v60 = vld [vmem:[#allocation5 + $0x78] sm:$0xff]
    %v61 = vld [vmem:[%s2] sm:$0x1]
    %v63 = vlaneseq
    %v64 = vshrl.u32 %v63, 7
    %v65 = vsub.s32 0, %v64
    %v66 = vrot.slane %v61, %v65
    %68 = vmatprep.subr.mxu0 0.0
    %69 = vmatpush1.msra.mxu0 %v45
    %70 = vmatprep.subr.mxu0 0.0
    %71 = vmatpush1.msra.mxu0 %v46
    %72 = vmatprep.subr.mxu0 0.0
    %73 = vmatpush1.msra.mxu0 %v47
    %74 = vmatprep.subr.mxu0 0.0
    %75 = vmatpush1.msra.mxu0 %v48
    %76 = vmatprep.subr.mxu0 0.0
    %77 = vmatpush1.msra.mxu0 %v49
    %78 = vmatprep.subr.mxu0 0.0
    %79 = vmatpush1.msra.mxu0 %v50
    %80 = vmatprep.subr.mxu0 0.0
    %81 = vmatpush1.msra.mxu0 %v51
    %82 = vmatprep.subr.mxu0 0.0
    %83 = vmatpush1.msra.mxu0 %v52
    %84 = vmatprep.subr.mxu0 0.0
    %85 = vmatpush1.msra.mxu0 %v53
    %86 = vmatprep.subr.mxu0 0.0
    %87 = vmatpush1.msra.mxu0 %v54
    %88 = vmatprep.subr.mxu0 0.0
    %89 = vmatpush1.msra.mxu0 %v55
    %90 = vmatprep.subr.mxu0 0.0
    %91 = vmatpush1.msra.mxu0 %v56
    %92 = vmatprep.subr.mxu0 0.0
    %93 = vmatpush1.msra.mxu0 %v57
    %94 = vmatprep.subr.mxu0 0.0
    %95 = vmatpush1.msra.mxu0 %v58
    %96 = vmatprep.subr.mxu0 0.0
    %97 = vmatpush1.msra.mxu0 %v59
    %98 = vmatprep.subr.mxu0 0.0
    %99 = vmatpush1.msra.mxu0 %v60
    %100 = vmatprep.subr.mxu0 0.0
    %101 = vmatpush1.msra.mxu0 0.0
    %102 = vmatprep.subr.mxu0 0.0
    %103 = vmatpush1.msra.mxu0 0.0
    %104 = vmatprep.subr.mxu0 0.0
    %105 = vmatpush1.msra.mxu0 0.0
    %106 = vmatprep.subr.mxu0 0.0
    %107 = vmatpush1.msra.mxu0 0.0
    %108 = vmatprep.subr.mxu0 0.0
    %109 = vmatpush1.msra.mxu0 0.0
    %110 = vmatprep.subr.mxu0 0.0
    %111 = vmatpush1.msra.mxu0 0.0
    %112 = vmatprep.subr.mxu0 0.0
    %113 = vmatpush1.msra.mxu0 0.0
    %114 = vmatprep.subr.mxu0 0.0
    %115 = vmatpush1.msra.mxu0 0.0
    %116 = vmatprep.subr.mxu0 0.0
    %117 = vmatpush1.msra.mxu0 0.0
    %118 = vmatprep.subr.mxu0 0.0
    %119 = vmatpush1.msra.mxu0 0.0
    %120 = vmatprep.subr.mxu0 0.0
    %121 = vmatpush1.msra.mxu0 0.0
    %122 = vmatprep.subr.mxu0 0.0
    %123 = vmatpush1.msra.mxu0 0.0
    %124 = vmatprep.subr.mxu0 0.0
    %125 = vmatpush1.msra.mxu0 0.0
    %126 = vmatprep.subr.mxu0 0.0
    %127 = vmatpush1.msra.mxu0 0.0
    %128 = vmatprep.subr.mxu0 0.0
    %129 = vmatpush1.msra.mxu0 0.0
    %130 = vmatprep.subr.mxu0 0.0
    %131 = vmatpush1.msra.mxu0 0.0
    %132 = vmatprep.mubr.f32.mxu0 0.0
    %133 = vmatmul.mubr.f32.gmra.mrb[0].mxu0 %v43
    %v134 = vpop.f32.mrb[0].mxu0
    %v135 = vadd.f32 %v66, %v134
    %v136 = vpop.f32.mrb[0].mxu0
    %137 = vmatprep.mubr.f32.mxu0 0.0
    %138 = vmatmul.mubr.f32.gmra.mrb[0].mxu0 %v44
    %v139 = vpop.f32.mrb[0].mxu0
    %v140 = vadd.f32 %v66, %v139
    %v141 = vpop.f32.mrb[0].mxu0
    %142 = vdwg.mxu0
    %143 = vst [vmem:[#allocation7] sm:$0xff] %v135
    %144 = vst [vmem:[#allocation7 + $0x8] sm:$0xff] %v140
    // Predicated region
    $region22: #{tpu_custom_call.1} parent=1 // pred_check
      _
    $region23: #{tpu_custom_call.1} parent=1 // pred_check_branch
      %146 = sbr.rel (0) target = $region25
    $region24: #{tpu_custom_call.1} parent=1 // pred_region
      %s148 = ssub.s32 256, 256
      %149 = vsyncadd [#allocation4], %s148
      %s150 = sshll.u32 [#allocation7], 4
      %s151 = int_to_ptr.vmem [resolvable:$true] %s150
      %156 = dma.vmem_to_hbm [thread:$0]  %s151, 256, %s3, [#allocation4], 128, 128, 8
    $region25: #{tpu_custom_call.1} parent=1 // pred_fallthru
      _
    // Predicated region
    $region26: #{tpu_custom_call.1} parent=1 // pred_check
      _
    $region27: #{tpu_custom_call.1} parent=1 // pred_check_branch
      %158 = sbr.rel (0) target = $region29
    $region28: #{tpu_custom_call.1} parent=1 // pred_region
      %159 = dma.done [#allocation4], 256
    $region29: #{tpu_custom_call.1} parent=1 // pred_fallthru
      _
    %160 = vsyncpa [#allocation3], 1
    %161 = vsyncpa [#allocation6], 1
    %162 = vsyncpa [#allocation4], 1

</llo_original>
